<compile_context>
chip_gen: v7x
topology: tpu7x:2x2x1
jax: 0.10.0
libtpu: 0.0.40
codegen_flags: <defaults>
</compile_context>

<pallas_src>
import jax
import jax.numpy as jnp
from jax.experimental import pallas as pl
from jax.experimental.pallas import tpu as pltpu

_LANE = 128
_WIDE = 8 * _LANE                      # 1024 lanes: one full f32 vreg per row
_TARGET_BLOCK_BYTES = 2 * 1024 * 1024  # ~2 MiB per input block


def _bce_kernel(out_ref, tg_ref, loss_ref):
    # Compute in f32 regardless of I/O dtype.
    p = out_ref[...].astype(jnp.float32)
    t = tg_ref[...].astype(jnp.float32)
    # PyTorch clamps the log terms at -100 BEFORE the target weighting, which
    # also avoids 0 * -inf = NaN.  Keep the clamp before the weighting.
    log_p = jnp.maximum(jnp.log(p), -100.0)
    log_1mp = jnp.maximum(jnp.log(1.0 - p), -100.0)
    # -(t*log_p + (1-t)*log_1mp) == -(log_1mp + t*(log_p - log_1mp))
    loss = -(log_1mp + t * (log_p - log_1mp))
    loss_ref[...] = loss.astype(loss_ref.dtype)


def _pallas_bce_2d(out2d, tg2d, tile_rows):
    rows, width = out2d.shape
    grid = (pl.cdiv(rows, tile_rows),)
    spec = pl.BlockSpec((tile_rows, width), lambda i: (i, 0))
    return pl.pallas_call(
        _bce_kernel,
        out_shape=jax.ShapeDtypeStruct((rows, width), out2d.dtype),
        grid_spec=pltpu.PrefetchScalarGridSpec(
            num_scalar_prefetch=0,
            grid=grid,
            in_specs=[spec, spec],
            out_specs=spec,
        ),
        compiler_params=pltpu.CompilerParams(
            dimension_semantics=("parallel",),
        ),
    )(out2d, tg2d)


def bce_loss_none(out, tg):
    """Elementwise BCE loss (reduction='none') via a Pallas TPU kernel."""
    assert out.shape == tg.shape, "out and tg must have the same shape"
    orig_shape = out.shape
    dtype = out.dtype
    n = out.size
    itemsize = jnp.dtype(dtype).itemsize

    # --- lay the flat data out as a lane-dense 2-D slab (no copy if aligned) --
    padded = False
    if n % _WIDE == 0:
        width = _WIDE                      # common NCHW case: free reshape
        out2d = out.reshape(-1, width)
        tg2d = tg.reshape(-1, width)
    elif n % _LANE == 0:
        width = _LANE                      # still copy-free, just narrower
        out2d = out.reshape(-1, width)
        tg2d = tg.reshape(-1, width)
    else:
        # Rare ragged case: one pad pass (0.5 keeps log() finite; padded
        # results are sliced away below).
        padded = True
        width = _WIDE
        pad = (-n) % _WIDE
        half = jnp.asarray(0.5, dtype)
        out2d = jnp.pad(out.reshape(-1), (0, pad), constant_values=half).reshape(-1, width)
        tg2d = jnp.pad(tg.reshape(-1), (0, pad), constant_values=half).reshape(-1, width)

    rows = out2d.shape[0]

    # --- pick a ~2 MiB row tile (multiple of 8 sublanes) ----------------------
    tile_rows = _TARGET_BLOCK_BYTES // (width * itemsize)
    tile_rows -= tile_rows % 8
    tile_rows = max(tile_rows, 8)
    if tile_rows >= rows:
        tile_rows = rows                   # single block covering the full array

    loss2d = _pallas_bce_2d(out2d, tg2d, tile_rows)

    if padded:
        return loss2d.reshape(-1)[:n].reshape(orig_shape)
    return loss2d.reshape(orig_shape)


def _bce_ref(out, tg):
    out = out.astype(jnp.float32)
    tg = tg.astype(jnp.float32)
    log_p = jnp.maximum(jnp.log(out), -100.0)
    log_1mp = jnp.maximum(jnp.log(1.0 - out), -100.0)
    return -(tg * log_p + (1.0 - tg) * log_1mp)


if __name__ == "__main__":
    key = jax.random.PRNGKey(0)
    k1, k2, k3, k4, k5, k6 = jax.random.split(key, 6)

    # Main test: small NCHW inputs, predictions in (0,1), binary targets.
    B, C, H, W = 2, 4, 16, 16
    out = jax.nn.sigmoid(jax.random.normal(k1, (B, C, H, W), dtype=jnp.float32))
    tg = (jax.random.uniform(k2, (B, C, H, W)) > 0.5).astype(jnp.float32)
    loss = jax.block_until_ready(bce_loss_none(out, tg))
    assert loss.shape == out.shape and loss.dtype == out.dtype
    assert jnp.allclose(loss, _bce_ref(out, tg), atol=1e-5, rtol=1e-5), "mismatch (main)"

    # Multi-block grid with a partial (masked) last block: rows=600, tile=512.
    out_b = jax.nn.sigmoid(jax.random.normal(k3, (1, 1, 600, 1024), dtype=jnp.float32))
    tg_b = (jax.random.uniform(k4, (1, 1, 600, 1024)) > 0.5).astype(jnp.float32)
    loss_b = jax.block_until_ready(bce_loss_none(out_b, tg_b))
    assert jnp.allclose(loss_b, _bce_ref(out_b, tg_b), atol=1e-5, rtol=1e-5), "mismatch (partial block)"

    # Ragged size (falls back to the padded path).
    out_c = jax.nn.sigmoid(jax.random.normal(k5, (3, 5, 7), dtype=jnp.float32))
    tg_c = (jax.random.uniform(k6, (3, 5, 7)) > 0.5).astype(jnp.float32)
    loss_c = jax.block_until_ready(bce_loss_none(out_c, tg_c))
    assert jnp.allclose(loss_c, _bce_ref(out_c, tg_c), atol=1e-5, rtol=1e-5), "mismatch (ragged)"

    print("KERNEL_OK")
</pallas_src>

<mosaic_0001>
module attributes {stable_mosaic.version = 11 : i64} {
  func.func @_bce_kernel(%arg0: i32, %arg1: memref<2x1024xf32, #tpu.memory_space<vmem>>, %arg2: memref<2x1024xf32, #tpu.memory_space<vmem>>, %arg3: memref<2x1024xf32, #tpu.memory_space<vmem>>) attributes {dimension_semantics = [#tpu.dimension_semantics<parallel>], iteration_bounds = array<i64: 1>, scalar_prefetch = 0 : i64, scratch_operands = 0 : i64, tpu.core_type = #tpu.core_type<tc>, window_params = [{transform_indices = @transform_0, window_bounds = array<i64: 2, 1024>}, {transform_indices = @transform_1, window_bounds = array<i64: 2, 1024>}, {transform_indices = @transform_2, window_bounds = array<i64: 2, 1024>}]} {
    %c0 = arith.constant 0 : index
    %c0_0 = arith.constant 0 : index
    %0 = vector.load %arg1[%c0, %c0_0] : memref<2x1024xf32, #tpu.memory_space<vmem>>, vector<2x1024xf32>
    %c0_1 = arith.constant 0 : index
    %c0_2 = arith.constant 0 : index
    %1 = vector.load %arg2[%c0_1, %c0_2] : memref<2x1024xf32, #tpu.memory_space<vmem>>, vector<2x1024xf32>
    %2 = math.log %0 : vector<2x1024xf32>
    %cst = arith.constant -1.000000e+02 : f32
    %3 = vector.broadcast %cst : f32 to vector<2x1024xf32>
    %4 = arith.maximumf %2, %3 : vector<2x1024xf32>
    %cst_3 = arith.constant 1.000000e+00 : f32
    %5 = vector.broadcast %cst_3 : f32 to vector<2x1024xf32>
    %6 = arith.subf %5, %0 : vector<2x1024xf32>
    %7 = math.log %6 : vector<2x1024xf32>
    %cst_4 = arith.constant -1.000000e+02 : f32
    %8 = vector.broadcast %cst_4 : f32 to vector<2x1024xf32>
    %9 = arith.maximumf %7, %8 : vector<2x1024xf32>
    %10 = arith.subf %4, %9 : vector<2x1024xf32>
    %11 = arith.mulf %1, %10 : vector<2x1024xf32>
    %12 = arith.addf %9, %11 : vector<2x1024xf32>
    %cst_5 = arith.constant 0.000000e+00 : f32
    %13 = vector.broadcast %cst_5 : f32 to vector<2x1024xf32>
    %14 = arith.subf %13, %12 : vector<2x1024xf32>
    %c0_6 = arith.constant 0 : index
    %c0_7 = arith.constant 0 : index
    %15 = vector.load %arg3[%c0_6, %c0_7] : memref<2x1024xf32, #tpu.memory_space<vmem>>, vector<2x1024xf32>
    tpu.vector_store %arg3[%c0_6, %c0_7], %14 {strides = array<i32>} : memref<2x1024xf32, #tpu.memory_space<vmem>>, vector<2x1024xf32>,
    return
  }
  func.func @transform_0(%arg0: i32) -> (i32, i32) {
    %c0_i32 = arith.constant 0 : i32
    %c0_i32_0 = arith.constant 0 : i32
    return %arg0, %c0_i32 : i32, i32
  }
  func.func @transform_1(%arg0: i32) -> (i32, i32) {
    %c0_i32 = arith.constant 0 : i32
    %c0_i32_0 = arith.constant 0 : i32
    return %arg0, %c0_i32 : i32, i32
  }
  func.func @transform_2(%arg0: i32) -> (i32, i32) {
    %c0_i32 = arith.constant 0 : i32
    %c0_i32_0 = arith.constant 0 : i32
    return %arg0, %c0_i32 : i32, i32
  }
}

</mosaic_0001>

<llo_original>
// kernel: tpu_custom_call.1
$region0: #{tpu_custom_call.1}
  #allocation0 [shape = 'u32[]', space=smem, size = 0x4, offset = 0x4, fixed_abs, tag = 'smem constant byte address 0x4 - core index']
  #allocation1 [shape = 'u32[144,128]{1,0:T(1,128)}', space=vmem, size = 0x12000, scoped, tag = 'internal scratch']
  %s0 = inlined_call_operand.hbm [shape: f32[2,1024], index: 0, kind: input, shape index: {}]
  %s1 = inlined_call_operand.hbm [shape: f32[2,1024], index: 1, kind: input, shape index: {}]
  %s2 = inlined_call_operand.hbm [shape: f32[2,1024], index: 2, kind: output, shape index: {}]
  %s3 = sld [smem:[#allocation0]]
  $region26: #{tpu_custom_call.1} parent=0
    _
  %s5 = ssub.s32 1, %s3
  %s6 = scalar_select 0, %s5, %s3
  $region1: #{tpu_custom_call.1} parent=0
    #allocation2 [shape = 'u8[8192]{0}', space=vmem, size = 0x2000, scoped, tag = 'input window, operand 0, single buffered']
    #allocation3 [shape = 's32[1]{0}', space=sflag, size = 0x4, scoped, tag = 'scoped memory for tpu_custom_call.1']
    #allocation4 [shape = 's32[1]{0}', space=sflag, size = 0x4, scoped, tag = 'scoped memory for tpu_custom_call.1']
    #allocation5 [shape = 'u8[8192]{0}', space=vmem, size = 0x2000, scoped, tag = 'input window, operand 1, single buffered']
    #allocation6 [shape = 's32[1]{0}', space=sflag, size = 0x4, scoped, tag = 'scoped memory for tpu_custom_call.1']
    #allocation7 [shape = 'u8[8192]{0}', space=vmem, size = 0x2000, scoped, tag = 'output window, operand 0, single buffered']
    %7 = vsyncpa [#allocation3], 0
    %8 = vsyncpa [#allocation6], 0
    %9 = vsyncpa [#allocation4], 0
    // Predicated region
    $region2: #{tpu_custom_call.1} parent=1 // pred_check
      _
    $region3: #{tpu_custom_call.1} parent=1 // pred_check_branch
      %11 = sbr.rel (0) target = $region5
    $region4: #{tpu_custom_call.1} parent=1 // pred_region
      %s13 = ssub.s32 256, 256
      %14 = vsyncadd [#allocation3], %s13
      %s16 = sshll.u32 [#allocation2], 4
      %s17 = int_to_ptr.vmem [resolvable:$true] %s16
      %19 = dma.hbm_to_vmem [thread:$0]  %s0, 256, %s17, [#allocation3]
    $region5: #{tpu_custom_call.1} parent=1 // pred_fallthru
      _
    // Predicated region
    $region6: #{tpu_custom_call.1} parent=1 // pred_check
      _
    $region7: #{tpu_custom_call.1} parent=1 // pred_check_branch
      %21 = sbr.rel (0) target = $region9
    $region8: #{tpu_custom_call.1} parent=1 // pred_region
      %s23 = ssub.s32 256, 256
      %24 = vsyncadd [#allocation6], %s23
      %s26 = sshll.u32 [#allocation5], 4
      %s27 = int_to_ptr.vmem [resolvable:$true] %s26
      %29 = dma.hbm_to_vmem [thread:$0]  %s1, 256, %s27, [#allocation6]
    $region9: #{tpu_custom_call.1} parent=1 // pred_fallthru
      _
    // Predicated region
    $region10: #{tpu_custom_call.1} parent=1 // pred_check
      _
    $region11: #{tpu_custom_call.1} parent=1 // pred_check_branch
      %31 = sbr.rel (0) target = $region13
    $region12: #{tpu_custom_call.1} parent=1 // pred_region
      %32 = dma.done [#allocation3], 256
    $region13: #{tpu_custom_call.1} parent=1 // pred_fallthru
      _
    // Predicated region
    $region14: #{tpu_custom_call.1} parent=1 // pred_check
      _
    $region15: #{tpu_custom_call.1} parent=1 // pred_check_branch
      %34 = sbr.rel (0) target = $region17
    $region16: #{tpu_custom_call.1} parent=1 // pred_region
      %35 = dma.done [#allocation6], 256
    $region17: #{tpu_custom_call.1} parent=1 // pred_fallthru
      _
    %v36 = vld [vmem:[#allocation2] sm:$0xff]
    %v37 = vld [vmem:[#allocation2 + $0x8] sm:$0xff]
    %v38 = vld [vmem:[#allocation5] sm:$0xff]
    %v39 = vld [vmem:[#allocation5 + $0x8] sm:$0xff]
    %v40 = vlog2.pop %v36
    %v41 = vmul.f32 %v40, 0.6931472
    %v42 = vlog2.pop %v37
    %v43 = vmul.f32 %v42, 0.6931472
    %v44 = vmax.f32 %v41, -100.0
    %v45 = vmax.f32 %v43, -100.0
    %v46 = vsub.f32 1.0, %v36
    %v47 = vsub.f32 1.0, %v37
    %v48 = vlog2.pop %v46
    %v49 = vmul.f32 %v48, 0.6931472
    %v50 = vlog2.pop %v47
    %v51 = vmul.f32 %v50, 0.6931472
    %v52 = vmax.f32 %v49, -100.0
    %v53 = vmax.f32 %v51, -100.0
    %v54 = vsub.f32 %v44, %v52
    %v55 = vsub.f32 %v45, %v53
    %v56 = vmul.f32 %v38, %v54
    %v57 = vmul.f32 %v39, %v55
    %v58 = vadd.f32 %v52, %v56
    %v59 = vadd.f32 %v53, %v57
    %v60 = vsub.f32 0.0, %v58
    %v61 = vsub.f32 0.0, %v59
    %62 = vst [vmem:[#allocation7] sm:$0xff] %v60
    %63 = vst [vmem:[#allocation7 + $0x8] sm:$0xff] %v61
    // Predicated region
    $region18: #{tpu_custom_call.1} parent=1 // pred_check
      _
    $region19: #{tpu_custom_call.1} parent=1 // pred_check_branch
      %65 = sbr.rel (0) target = $region21
    $region20: #{tpu_custom_call.1} parent=1 // pred_region
      %s67 = ssub.s32 256, 256
      %68 = vsyncadd [#allocation4], %s67
      %s70 = sshll.u32 [#allocation7], 4
      %s71 = int_to_ptr.vmem [resolvable:$true] %s70
      %73 = dma.vmem_to_hbm [thread:$0]  %s71, 256, %s2, [#allocation4]
    $region21: #{tpu_custom_call.1} parent=1 // pred_fallthru
      _
    // Predicated region
    $region22: #{tpu_custom_call.1} parent=1 // pred_check
      _
    $region23: #{tpu_custom_call.1} parent=1 // pred_check_branch
      %75 = sbr.rel (0) target = $region25
    $region24: #{tpu_custom_call.1} parent=1 // pred_region
      %76 = dma.done [#allocation4], 256
    $region25: #{tpu_custom_call.1} parent=1 // pred_fallthru
      _
    %77 = vsyncpa [#allocation3], 1
    %78 = vsyncpa [#allocation6], 1
    %79 = vsyncpa [#allocation4], 1

</llo_original>
